<compile_context>
chip_gen: v7x
topology: tpu7x:2x2x1
jax: 0.10.0
libtpu: 0.0.40
codegen_flags: <defaults>
</compile_context>

<pallas_src>
import math
from functools import partial

import jax
import jax.numpy as jnp
from jax import lax
from jax.experimental import pallas as pl
from jax.experimental.pallas import tpu as pltpu


def _mm(x, y, cdims):
    """dot_general with explicit contracting dims, f32 accumulation on the MXU."""
    return lax.dot_general(x, y, (cdims, ((), ())),
                           preferred_element_type=jnp.float32)


def decoder_layer_kernel(tgt_ref, mem_ref, w_ref, b_ref, out_ref, *,
                         nhead, n_batch):
    bf16 = jnp.bfloat16

    tgt = tgt_ref[...]                        # (M, E) f32, row m = l*N + n
    mem = mem_ref[...]                        # (P, E) f32, row p = s*N + n
    M, E = tgt.shape
    P = mem.shape[0]
    F = (w_ref.shape[0] - 4 * E) // 2         # dim_feedforward
    hd = E // nhead

    # ---- packed parameters (one weight slab, one bias slab) -----------------
    wq  = w_ref[0:E, :]                       # (E, E)   1/sqrt(hd) pre-folded
    wkv = w_ref[E:3 * E, :]                   # (2E, E)  fused K/V projection
    wo  = w_ref[3 * E:4 * E, :]               # (E, E)
    w1  = w_ref[4 * E:4 * E + F, :]           # (F, E)
    w2t = w_ref[4 * E + F:4 * E + 2 * F, :]   # (F, E)   = W2^T
    bq = b_ref[0:1, 0:E]                      # row biases, f32
    bo = b_ref[1:2, 0:E]                      # bo_eff = bo + Wo @ bv
    b1 = b_ref[2:3, 0:F]
    b2 = b_ref[3:4, 0:E]

    tgt_bf = tgt.astype(bf16)
    mem_bf = mem.astype(bf16)

    # ---- projections: two full-batch matmuls --------------------------------
    # q row-major (M, E); scale and q-bias folded in.  LHS contracts last dim.
    q = (_mm(tgt_bf, wq, ((1,), (1,))) + bq).astype(bf16)        # (M, E)
    # fused K/V, feature-major: kvT[f, p]; f < E -> K, f >= E -> V.
    # (K bias dropped: softmax-invariant.  V bias folded into bo_eff.)
    kvT = _mm(wkv, mem_bf, ((1,), (1,))).astype(bf16)            # (2E, P)

    # ---- cross-batch mask, generated in-kernel -------------------------------
    row_n = lax.broadcasted_iota(jnp.int32, (M, P), 0) % n_batch
    col_n = lax.broadcasted_iota(jnp.int32, (M, P), 1) % n_batch
    same_batch = row_n == col_n

    # ---- per-head attention over the flattened batch --------------------------
    heads = []
    for h in range(nhead):
        lo = h * hd
        qh = q[:, lo:lo + hd]                 # (M, hd)  lane slice
        kh = kvT[lo:lo + hd, :]               # (hd, P)  sublane-aligned slice
        vh = kvT[E + lo:E + lo + hd, :]       # (hd, P)

        s = _mm(qh, kh, ((1,), (0,)))         # (M, P) f32, natural MXU matmul
        s = jnp.where(same_batch, s, -1e30)   # kill cross-batch pairs
        s = s - jnp.max(s, axis=-1, keepdims=True)
        p = jnp.exp(s)
        denom = jnp.sum(p, axis=-1, keepdims=True)
        p = (p * pl.reciprocal(denom, approx=True)).astype(bf16)  # EUP recip

        # feature-major head output: ahT[d, m] = sum_p p[m, p] * vh[d, p]
        heads.append(_mm(vh, p, ((1,), (1,))))                    # (hd, M) f32

    # Heads stacked along the sublane axis -> one depth-E output projection.
    aT = jnp.concatenate(heads, axis=0).astype(bf16)              # (E, M)
    attn = _mm(aT, wo, ((0,), (1,))) + bo                         # (M, E) f32

    # ---- feed-forward: Linear -> ReLU -> Linear -> ReLU ----------------------
    ffn = jnp.maximum(_mm(attn.astype(bf16), w1, ((1,), (1,))) + b1, 0.0)   # (M, F)
    out = jnp.maximum(_mm(ffn.astype(bf16), w2t, ((1,), (0,))) + b2, 0.0)   # (M, E)

    out_ref[...] = out


def pack_params(params, *, nhead):
    """One-time packing of PyTorch-layout parameters into two DMA slabs."""
    E = params["wq"].shape[0]
    F = params["w1"].shape[0]
    hd = E // nhead
    scale = 1.0 / math.sqrt(hd)

    w_slab = jnp.concatenate(
        [params["wq"] * scale, params["wk"], params["wv"],
         params["wo"], params["w1"], params["w2"].T],
        axis=0).astype(jnp.bfloat16)                              # (4E+2F, E)

    width = max(E, F)

    def row(b):
        b = jnp.asarray(b, jnp.float32).reshape(1, -1)
        return jnp.pad(b, ((0, 0), (0, width - b.shape[1])))

    # Exact folds: K bias is a softmax no-op; V bias folds into the out-proj bias.
    bo_eff = params["bo"] + params["bv"] @ params["wo"].T         # (1, E)
    b_slab = jnp.concatenate(
        [row(params["bq"] * scale), row(bo_eff), row(params["b1"]), row(params["b2"])],
        axis=0)                                                   # (4, width) f32
    return w_slab, b_slab


@partial(jax.jit, static_argnames=("nhead",))
def transformer_decoder_layer(tgt_sme, mem_sme, w_slab, b_slab, *, nhead):
    """tgt_sme: (L, N, E), mem_sme: (S, N, E) -> (L, N, E)  (PyTorch seq-first)."""
    L, N, E = tgt_sme.shape
    S = mem_sme.shape[0]
    M, P = L * N, S * N

    # l-major flatten: pure dim-collapse (layout-preserving), no transpose.
    tgt_flat = tgt_sme.reshape(M, E)
    mem_flat = mem_sme.reshape(P, E)

    vmem = pl.BlockSpec(memory_space=pltpu.MemorySpace.VMEM)
    out_flat = pl.pallas_call(
        partial(decoder_layer_kernel, nhead=nhead, n_batch=N),
        out_shape=jax.ShapeDtypeStruct((M, E), jnp.float32),
        in_specs=[vmem, vmem, vmem, vmem],
        out_specs=vmem,
    )(tgt_flat, mem_flat, w_slab, b_slab)

    return out_flat.reshape(L, N, E)


def reference_jax(tgt_sme, mem_sme, params, *, nhead):
    """Pure-JAX (f32) replica of the PyTorch forward, for validation."""
    L, N, E = tgt_sme.shape
    S = mem_sme.shape[0]
    hd = E // nhead
    scale = 1.0 / math.sqrt(hd)

    tgt = jnp.transpose(tgt_sme, (1, 0, 2))     # (N, L, E)
    mem = jnp.transpose(mem_sme, (1, 0, 2))     # (N, S, E)

    q = tgt @ params["wq"].T + params["bq"]
    k = mem @ params["wk"].T + params["bk"]
    v = mem @ params["wv"].T + params["bv"]

    q = q.reshape(N, L, nhead, hd).transpose(0, 2, 1, 3)
    k = k.reshape(N, S, nhead, hd).transpose(0, 2, 1, 3)
    v = v.reshape(N, S, nhead, hd).transpose(0, 2, 1, 3)

    s = jnp.einsum("nhld,nhsd->nhls", q, k) * scale
    p = jax.nn.softmax(s, axis=-1)
    a = jnp.einsum("nhls,nhsd->nhld", p, v)
    a = a.transpose(0, 2, 1, 3).reshape(N, L, E)

    attn_out = a @ params["wo"].T + params["bo"]
    ff = jnp.maximum(attn_out @ params["w1"].T + params["b1"], 0.0)
    out = jnp.maximum(ff @ params["w2"].T + params["b2"], 0.0)
    return jnp.transpose(out, (1, 0, 2))        # (L, N, E)


def init_params(key, d_model, dim_feedforward):
    keys = jax.random.split(key, 12)
    s = 0.1
    return {
        "wq": s * jax.random.normal(keys[0], (d_model, d_model), jnp.float32),
        "wk": s * jax.random.normal(keys[1], (d_model, d_model), jnp.float32),
        "wv": s * jax.random.normal(keys[2], (d_model, d_model), jnp.float32),
        "bq": s * jax.random.normal(keys[3], (1, d_model), jnp.float32),
        "bk": s * jax.random.normal(keys[4], (1, d_model), jnp.float32),
        "bv": s * jax.random.normal(keys[5], (1, d_model), jnp.float32),
        "wo": s * jax.random.normal(keys[6], (d_model, d_model), jnp.float32),
        "bo": s * jax.random.normal(keys[7], (1, d_model), jnp.float32),
        "w1": s * jax.random.normal(keys[8], (dim_feedforward, d_model), jnp.float32),
        "b1": s * jax.random.normal(keys[9], (1, dim_feedforward), jnp.float32),
        "w2": s * jax.random.normal(keys[10], (d_model, dim_feedforward), jnp.float32),
        "b2": s * jax.random.normal(keys[11], (1, d_model), jnp.float32),
    }


if __name__ == "__main__":
    d_model, nhead, dim_feedforward = 32, 4, 128
    L, S, N = 8, 12, 2          # tgt seq len, memory seq len, batch

    key = jax.random.PRNGKey(0)
    k_tgt, k_mem, k_par = jax.random.split(key, 3)
    tgt = jax.random.normal(k_tgt, (L, N, d_model), jnp.float32)
    memory = jax.random.normal(k_mem, (S, N, d_model), jnp.float32)
    params = init_params(k_par, d_model, dim_feedforward)

    # One-time parameter packing (outside the per-call path).
    w_slab, b_slab = pack_params(params, nhead=nhead)

    out = transformer_decoder_layer(tgt, memory, w_slab, b_slab, nhead=nhead)
    out = jax.block_until_ready(out)

    ref = reference_jax(tgt, memory, params, nhead=nhead)
    assert out.shape == (L, N, d_model)
    # Tolerance covers the documented bf16 MXU operands + approx EUP reciprocal.
    assert jnp.allclose(out, ref, atol=2e-2, rtol=2e-2), "mismatch vs pure-JAX reference"

    print("KERNEL_OK")
</pallas_src>

<mosaic_0001>
module attributes {stable_mosaic.version = 11 : i64} {
  func.func @decoder_layer_kernel(%arg0: memref<16x32xf32, #tpu.memory_space<vmem>>, %arg1: memref<24x32xf32, #tpu.memory_space<vmem>>, %arg2: memref<384x32xbf16, #tpu.memory_space<vmem>>, %arg3: memref<4x128xf32, #tpu.memory_space<vmem>>, %arg4: memref<16x32xf32, #tpu.memory_space<vmem>>) attributes {dimension_semantics = [], scalar_prefetch = 0 : i64, scratch_operands = 0 : i64, tpu.core_type = #tpu.core_type<tc>} {
    %c0 = arith.constant 0 : index
    %c0_0 = arith.constant 0 : index
    %0 = vector.load %arg0[%c0, %c0_0] : memref<16x32xf32, #tpu.memory_space<vmem>>, vector<16x32xf32>
    %c0_1 = arith.constant 0 : index
    %c0_2 = arith.constant 0 : index
    %1 = vector.load %arg1[%c0_1, %c0_2] : memref<24x32xf32, #tpu.memory_space<vmem>>, vector<24x32xf32>
    %c0_3 = arith.constant 0 : index
    %c0_4 = arith.constant 0 : index
    %2 = vector.load %arg2[%c0_3, %c0_4] : memref<384x32xbf16, #tpu.memory_space<vmem>>, vector<32x32xbf16>
    %c32 = arith.constant 32 : index
    %c0_5 = arith.constant 0 : index
    %3 = vector.load %arg2[%c32, %c0_5] : memref<384x32xbf16, #tpu.memory_space<vmem>>, vector<64x32xbf16>
    %c96 = arith.constant 96 : index
    %c0_6 = arith.constant 0 : index
    %4 = vector.load %arg2[%c96, %c0_6] : memref<384x32xbf16, #tpu.memory_space<vmem>>, vector<32x32xbf16>
    %c128 = arith.constant 128 : index
    %c0_7 = arith.constant 0 : index
    %5 = vector.load %arg2[%c128, %c0_7] : memref<384x32xbf16, #tpu.memory_space<vmem>>, vector<128x32xbf16>
    %c256 = arith.constant 256 : index
    %c0_8 = arith.constant 0 : index
    %6 = vector.load %arg2[%c256, %c0_8] : memref<384x32xbf16, #tpu.memory_space<vmem>>, vector<128x32xbf16>
    %c0_9 = arith.constant 0 : index
    %c0_10 = arith.constant 0 : index
    %7 = vector.load %arg3[%c0_9, %c0_10] : memref<4x128xf32, #tpu.memory_space<vmem>>, vector<1x32xf32>
    %c1 = arith.constant 1 : index
    %c0_11 = arith.constant 0 : index
    %8 = vector.load %arg3[%c1, %c0_11] : memref<4x128xf32, #tpu.memory_space<vmem>>, vector<1x32xf32>
    %c2 = arith.constant 2 : index
    %c0_12 = arith.constant 0 : index
    %9 = vector.load %arg3[%c2, %c0_12] : memref<4x128xf32, #tpu.memory_space<vmem>>, vector<1x128xf32>
    %c3 = arith.constant 3 : index
    %c0_13 = arith.constant 0 : index
    %10 = vector.load %arg3[%c3, %c0_13] : memref<4x128xf32, #tpu.memory_space<vmem>>, vector<1x32xf32>
    %11 = arith.truncf %0 : vector<16x32xf32> to vector<16x32xbf16>
    %12 = arith.truncf %1 : vector<24x32xf32> to vector<24x32xbf16>
    %cst = arith.constant dense<0.000000e+00> : vector<16x32xf32>
    %13 = tpu.matmul %11, %2, %cst {dimension_numbers = #tpu.dot_dimension_numbers<[1], [1], [0], [0], [0, 0, 1, 0], [], []>} : vector<16x32xbf16>, vector<32x32xbf16>, vector<16x32xf32> -> vector<16x32xf32>
    %14 = vector.broadcast %7 : vector<1x32xf32> to vector<16x32xf32>
    %15 = arith.addf %13, %14 : vector<16x32xf32>
    %16 = arith.truncf %15 : vector<16x32xf32> to vector<16x32xbf16>
    %cst_14 = arith.constant dense<0.000000e+00> : vector<64x24xf32>
    %17 = tpu.matmul %3, %12, %cst_14 {dimension_numbers = #tpu.dot_dimension_numbers<[1], [1], [0], [0], [0, 0, 1, 0], [], []>} : vector<64x32xbf16>, vector<24x32xbf16>, vector<64x24xf32> -> vector<64x24xf32>
    %18 = arith.truncf %17 : vector<64x24xf32> to vector<64x24xbf16>
    %19 = tpu.iota {dimensions = array<i32: 0>} : vector<16x24xi32>
    %c2_i32 = arith.constant 2 : i32
    %c0_i32 = arith.constant 0 : i32
    %20 = arith.cmpi eq, %c2_i32, %c0_i32 : i32
    %c1_i32 = arith.constant 1 : i32
    %21 = arith.select %20, %c1_i32, %c2_i32 : i32
    %22 = vector.broadcast %21 : i32 to vector<16x24xi32>
    %23 = arith.remsi %19, %22 : vector<16x24xi32>
    %c0_i32_15 = arith.constant 0 : i32
    %24 = vector.broadcast %c0_i32_15 : i32 to vector<16x24xi32>
    %25 = arith.cmpi ne, %23, %24 : vector<16x24xi32>
    %c0_i32_16 = arith.constant 0 : i32
    %26 = vector.broadcast %c0_i32_16 : i32 to vector<16x24xi32>
    %27 = arith.cmpi slt, %23, %26 : vector<16x24xi32>
    %c0_i32_17 = arith.constant 0 : i32
    %28 = arith.cmpi slt, %21, %c0_i32_17 : i32
    %29 = vector.broadcast %28 : i1 to vector<16x24xi1>
    %30 = vector.broadcast %29 : vector<16x24xi1> to vector<16x24xi1>
    %31 = arith.xori %27, %30 : vector<16x24xi1>
    %32 = arith.andi %31, %25 : vector<16x24xi1>
    %33 = vector.broadcast %21 : i32 to vector<16x24xi32>
    %34 = arith.addi %23, %33 : vector<16x24xi32>
    %35 = arith.select %32, %34, %23 : vector<16x24xi1>, vector<16x24xi32>
    %36 = tpu.iota {dimensions = array<i32: 1>} : vector<16x24xi32>
    %c2_i32_18 = arith.constant 2 : i32
    %c0_i32_19 = arith.constant 0 : i32
    %37 = arith.cmpi eq, %c2_i32_18, %c0_i32_19 : i32
    %c1_i32_20 = arith.constant 1 : i32
    %38 = arith.select %37, %c1_i32_20, %c2_i32_18 : i32
    %39 = vector.broadcast %38 : i32 to vector<16x24xi32>
    %40 = arith.remsi %36, %39 : vector<16x24xi32>
    %c0_i32_21 = arith.constant 0 : i32
    %41 = vector.broadcast %c0_i32_21 : i32 to vector<16x24xi32>
    %42 = arith.cmpi ne, %40, %41 : vector<16x24xi32>
    %c0_i32_22 = arith.constant 0 : i32
    %43 = vector.broadcast %c0_i32_22 : i32 to vector<16x24xi32>
    %44 = arith.cmpi slt, %40, %43 : vector<16x24xi32>
    %c0_i32_23 = arith.constant 0 : i32
    %45 = arith.cmpi slt, %38, %c0_i32_23 : i32
    %46 = vector.broadcast %45 : i1 to vector<16x24xi1>
    %47 = vector.broadcast %46 : vector<16x24xi1> to vector<16x24xi1>
    %48 = arith.xori %44, %47 : vector<16x24xi1>
    %49 = arith.andi %48, %42 : vector<16x24xi1>
    %50 = vector.broadcast %38 : i32 to vector<16x24xi32>
    %51 = arith.addi %40, %50 : vector<16x24xi32>
    %52 = arith.select %49, %51, %40 : vector<16x24xi1>, vector<16x24xi32>
    %53 = arith.cmpi eq, %35, %52 : vector<16x24xi32>
    %54 = vector.extract_strided_slice %16 {offsets = [0, 0], sizes = [16, 8], strides = [1, 1]} : vector<16x32xbf16> to vector<16x8xbf16>
    %55 = vector.extract_strided_slice %18 {offsets = [0, 0], sizes = [8, 24], strides = [1, 1]} : vector<64x24xbf16> to vector<8x24xbf16>
    %56 = vector.extract_strided_slice %18 {offsets = [32, 0], sizes = [8, 24], strides = [1, 1]} : vector<64x24xbf16> to vector<8x24xbf16>
    %cst_24 = arith.constant dense<0.000000e+00> : vector<16x24xf32>
    %57 = tpu.matmul %54, %55, %cst_24 {dimension_numbers = #tpu.dot_dimension_numbers<[1], [0], [0], [1], [0, 0, 1, 1], [], []>} : vector<16x8xbf16>, vector<8x24xbf16>, vector<16x24xf32> -> vector<16x24xf32>
    %cst_25 = arith.constant -1.000000e+30 : f32
    %58 = vector.broadcast %cst_25 : f32 to vector<16x24xf32>
    %59 = arith.select %53, %57, %58 : vector<16x24xi1>, vector<16x24xf32>
    %cst_26 = arith.constant dense<0xFF800000> : vector<16xf32>
    %60 = vector.multi_reduction <maximumf>, %59, %cst_26 [1] : vector<16x24xf32> to vector<16xf32>
    %61 = vector.shape_cast %60 : vector<16xf32> to vector<16x1xf32>
    %62 = vector.broadcast %61 : vector<16x1xf32> to vector<16x24xf32>
    %63 = arith.subf %59, %62 : vector<16x24xf32>
    %64 = math.exp %63 : vector<16x24xf32>
    %cst_27 = arith.constant dense<0.000000e+00> : vector<16xf32>
    %65 = vector.multi_reduction <add>, %64, %cst_27 [1] : vector<16x24xf32> to vector<16xf32>
    %66 = vector.shape_cast %65 : vector<16xf32> to vector<16x1xf32>
    %67 = tpu.reciprocal %66 {approx = true} : vector<16x1xf32> -> vector<16x1xf32>
    %68 = vector.broadcast %67 : vector<16x1xf32> to vector<16x24xf32>
    %69 = arith.mulf %64, %68 : vector<16x24xf32>
    %70 = arith.truncf %69 : vector<16x24xf32> to vector<16x24xbf16>
    %cst_28 = arith.constant dense<0.000000e+00> : vector<8x16xf32>
    %71 = tpu.matmul %56, %70, %cst_28 {dimension_numbers = #tpu.dot_dimension_numbers<[1], [1], [0], [0], [0, 0, 1, 0], [], []>} : vector<8x24xbf16>, vector<16x24xbf16>, vector<8x16xf32> -> vector<8x16xf32>
    %72 = vector.extract_strided_slice %16 {offsets = [0, 8], sizes = [16, 8], strides = [1, 1]} : vector<16x32xbf16> to vector<16x8xbf16>
    %73 = vector.extract_strided_slice %18 {offsets = [8, 0], sizes = [8, 24], strides = [1, 1]} : vector<64x24xbf16> to vector<8x24xbf16>
    %74 = vector.extract_strided_slice %18 {offsets = [40, 0], sizes = [8, 24], strides = [1, 1]} : vector<64x24xbf16> to vector<8x24xbf16>
    %cst_29 = arith.constant dense<0.000000e+00> : vector<16x24xf32>
    %75 = tpu.matmul %72, %73, %cst_29 {dimension_numbers = #tpu.dot_dimension_numbers<[1], [0], [0], [1], [0, 0, 1, 1], [], []>} : vector<16x8xbf16>, vector<8x24xbf16>, vector<16x24xf32> -> vector<16x24xf32>
    %cst_30 = arith.constant -1.000000e+30 : f32
    %76 = vector.broadcast %cst_30 : f32 to vector<16x24xf32>
    %77 = arith.select %53, %75, %76 : vector<16x24xi1>, vector<16x24xf32>
    %cst_31 = arith.constant dense<0xFF800000> : vector<16xf32>
    %78 = vector.multi_reduction <maximumf>, %77, %cst_31 [1] : vector<16x24xf32> to vector<16xf32>
    %79 = vector.shape_cast %78 : vector<16xf32> to vector<16x1xf32>
    %80 = vector.broadcast %79 : vector<16x1xf32> to vector<16x24xf32>
    %81 = arith.subf %77, %80 : vector<16x24xf32>
    %82 = math.exp %81 : vector<16x24xf32>
    %cst_32 = arith.constant dense<0.000000e+00> : vector<16xf32>
    %83 = vector.multi_reduction <add>, %82, %cst_32 [1] : vector<16x24xf32> to vector<16xf32>
    %84 = vector.shape_cast %83 : vector<16xf32> to vector<16x1xf32>
    %85 = tpu.reciprocal %84 {approx = true} : vector<16x1xf32> -> vector<16x1xf32>
    %86 = vector.broadcast %85 : vector<16x1xf32> to vector<16x24xf32>
    %87 = arith.mulf %82, %86 : vector<16x24xf32>
    %88 = arith.truncf %87 : vector<16x24xf32> to vector<16x24xbf16>
    %cst_33 = arith.constant dense<0.000000e+00> : vector<8x16xf32>
    %89 = tpu.matmul %74, %88, %cst_33 {dimension_numbers = #tpu.dot_dimension_numbers<[1], [1], [0], [0], [0, 0, 1, 0], [], []>} : vector<8x24xbf16>, vector<16x24xbf16>, vector<8x16xf32> -> vector<8x16xf32>
    %90 = vector.extract_strided_slice %16 {offsets = [0, 16], sizes = [16, 8], strides = [1, 1]} : vector<16x32xbf16> to vector<16x8xbf16>
    %91 = vector.extract_strided_slice %18 {offsets = [16, 0], sizes = [8, 24], strides = [1, 1]} : vector<64x24xbf16> to vector<8x24xbf16>
    %92 = vector.extract_strided_slice %18 {offsets = [48, 0], sizes = [8, 24], strides = [1, 1]} : vector<64x24xbf16> to vector<8x24xbf16>
    %cst_34 = arith.constant dense<0.000000e+00> : vector<16x24xf32>
    %93 = tpu.matmul %90, %91, %cst_34 {dimension_numbers = #tpu.dot_dimension_numbers<[1], [0], [0], [1], [0, 0, 1, 1], [], []>} : vector<16x8xbf16>, vector<8x24xbf16>, vector<16x24xf32> -> vector<16x24xf32>
    %cst_35 = arith.constant -1.000000e+30 : f32
    %94 = vector.broadcast %cst_35 : f32 to vector<16x24xf32>
    %95 = arith.select %53, %93, %94 : vector<16x24xi1>, vector<16x24xf32>
    %cst_36 = arith.constant dense<0xFF800000> : vector<16xf32>
    %96 = vector.multi_reduction <maximumf>, %95, %cst_36 [1] : vector<16x24xf32> to vector<16xf32>
    %97 = vector.shape_cast %96 : vector<16xf32> to vector<16x1xf32>
    %98 = vector.broadcast %97 : vector<16x1xf32> to vector<16x24xf32>
    %99 = arith.subf %95, %98 : vector<16x24xf32>
    %100 = math.exp %99 : vector<16x24xf32>
    %cst_37 = arith.constant dense<0.000000e+00> : vector<16xf32>
    %101 = vector.multi_reduction <add>, %100, %cst_37 [1] : vector<16x24xf32> to vector<16xf32>
    %102 = vector.shape_cast %101 : vector<16xf32> to vector<16x1xf32>
    %103 = tpu.reciprocal %102 {approx = true} : vector<16x1xf32> -> vector<16x1xf32>
    %104 = vector.broadcast %103 : vector<16x1xf32> to vector<16x24xf32>
    %105 = arith.mulf %100, %104 : vector<16x24xf32>
    %106 = arith.truncf %105 : vector<16x24xf32> to vector<16x24xbf16>
    %cst_38 = arith.constant dense<0.000000e+00> : vector<8x16xf32>
    %107 = tpu.matmul %92, %106, %cst_38 {dimension_numbers = #tpu.dot_dimension_numbers<[1], [1], [0], [0], [0, 0, 1, 0], [], []>} : vector<8x24xbf16>, vector<16x24xbf16>, vector<8x16xf32> -> vector<8x16xf32>
    %108 = vector.extract_strided_slice %16 {offsets = [0, 24], sizes = [16, 8], strides = [1, 1]} : vector<16x32xbf16> to vector<16x8xbf16>
    %109 = vector.extract_strided_slice %18 {offsets = [24, 0], sizes = [8, 24], strides = [1, 1]} : vector<64x24xbf16> to vector<8x24xbf16>
    %110 = vector.extract_strided_slice %18 {offsets = [56, 0], sizes = [8, 24], strides = [1, 1]} : vector<64x24xbf16> to vector<8x24xbf16>
    %cst_39 = arith.constant dense<0.000000e+00> : vector<16x24xf32>
    %111 = tpu.matmul %108, %109, %cst_39 {dimension_numbers = #tpu.dot_dimension_numbers<[1], [0], [0], [1], [0, 0, 1, 1], [], []>} : vector<16x8xbf16>, vector<8x24xbf16>, vector<16x24xf32> -> vector<16x24xf32>
    %cst_40 = arith.constant -1.000000e+30 : f32
    %112 = vector.broadcast %cst_40 : f32 to vector<16x24xf32>
    %113 = arith.select %53, %111, %112 : vector<16x24xi1>, vector<16x24xf32>
    %cst_41 = arith.constant dense<0xFF800000> : vector<16xf32>
    %114 = vector.multi_reduction <maximumf>, %113, %cst_41 [1] : vector<16x24xf32> to vector<16xf32>
    %115 = vector.shape_cast %114 : vector<16xf32> to vector<16x1xf32>
    %116 = vector.broadcast %115 : vector<16x1xf32> to vector<16x24xf32>
    %117 = arith.subf %113, %116 : vector<16x24xf32>
    %118 = math.exp %117 : vector<16x24xf32>
    %cst_42 = arith.constant dense<0.000000e+00> : vector<16xf32>
    %119 = vector.multi_reduction <add>, %118, %cst_42 [1] : vector<16x24xf32> to vector<16xf32>
    %120 = vector.shape_cast %119 : vector<16xf32> to vector<16x1xf32>
    %121 = tpu.reciprocal %120 {approx = true} : vector<16x1xf32> -> vector<16x1xf32>
    %122 = vector.broadcast %121 : vector<16x1xf32> to vector<16x24xf32>
    %123 = arith.mulf %118, %122 : vector<16x24xf32>
    %124 = arith.truncf %123 : vector<16x24xf32> to vector<16x24xbf16>
    %cst_43 = arith.constant dense<0.000000e+00> : vector<8x16xf32>
    %125 = tpu.matmul %110, %124, %cst_43 {dimension_numbers = #tpu.dot_dimension_numbers<[1], [1], [0], [0], [0, 0, 1, 0], [], []>} : vector<8x24xbf16>, vector<16x24xbf16>, vector<8x16xf32> -> vector<8x16xf32>
    %126 = tpu.concatenate %71, %89, %107, %125 in 0 : vector<8x16xf32>, vector<8x16xf32>, vector<8x16xf32>, vector<8x16xf32> -> vector<32x16xf32>
    %127 = arith.truncf %126 : vector<32x16xf32> to vector<32x16xbf16>
    %cst_44 = arith.constant dense<0.000000e+00> : vector<16x32xf32>
    %128 = tpu.matmul %127, %4, %cst_44 {dimension_numbers = #tpu.dot_dimension_numbers<[0], [1], [1], [0], [0, 1, 1, 0], [], []>} : vector<32x16xbf16>, vector<32x32xbf16>, vector<16x32xf32> -> vector<16x32xf32>
    %129 = vector.broadcast %8 : vector<1x32xf32> to vector<16x32xf32>
    %130 = arith.addf %128, %129 : vector<16x32xf32>
    %131 = arith.truncf %130 : vector<16x32xf32> to vector<16x32xbf16>
    %cst_45 = arith.constant dense<0.000000e+00> : vector<16x128xf32>
    %132 = tpu.matmul %131, %5, %cst_45 {dimension_numbers = #tpu.dot_dimension_numbers<[1], [1], [0], [0], [0, 0, 1, 0], [], []>} : vector<16x32xbf16>, vector<128x32xbf16>, vector<16x128xf32> -> vector<16x128xf32>
    %133 = vector.broadcast %9 : vector<1x128xf32> to vector<16x128xf32>
    %134 = arith.addf %132, %133 : vector<16x128xf32>
    %cst_46 = arith.constant 0.000000e+00 : f32
    %135 = vector.broadcast %cst_46 : f32 to vector<16x128xf32>
    %136 = arith.maximumf %134, %135 : vector<16x128xf32>
    %137 = arith.truncf %136 : vector<16x128xf32> to vector<16x128xbf16>
    %cst_47 = arith.constant dense<0.000000e+00> : vector<16x32xf32>
    %138 = tpu.matmul %137, %6, %cst_47 {dimension_numbers = #tpu.dot_dimension_numbers<[1], [0], [0], [1], [0, 0, 1, 1], [], []>} : vector<16x128xbf16>, vector<128x32xbf16>, vector<16x32xf32> -> vector<16x32xf32>
    %139 = vector.broadcast %10 : vector<1x32xf32> to vector<16x32xf32>
    %140 = arith.addf %138, %139 : vector<16x32xf32>
    %cst_48 = arith.constant 0.000000e+00 : f32
    %141 = vector.broadcast %cst_48 : f32 to vector<16x32xf32>
    %142 = arith.maximumf %140, %141 : vector<16x32xf32>
    %c0_49 = arith.constant 0 : index
    %c0_50 = arith.constant 0 : index
    %143 = vector.load %arg4[%c0_49, %c0_50] : memref<16x32xf32, #tpu.memory_space<vmem>>, vector<16x32xf32>
    tpu.vector_store %arg4[%c0_49, %c0_50], %142 {strides = array<i32>} : memref<16x32xf32, #tpu.memory_space<vmem>>, vector<16x32xf32>,
    return
  }
}

</mosaic_0001>

<llo_original>
// kernel: transformer_decoder_layer.1
$region0: #{transformer_decoder_layer.1}
  #allocation0 [shape = 'u32[]', space=smem, size = 0x4, offset = 0x4, fixed_abs, tag = 'smem constant byte address 0x4 - core index']
  #allocation1 [shape = 'u32[144,128]{1,0:T(1,128)}', space=vmem, size = 0x12000, scoped, tag = 'internal scratch']
  %s0 = inlined_call_operand.vmem [shape: f32[16,32], index: 0, kind: input, shape index: {}]
  %s1 = inlined_call_operand.vmem [shape: f32[24,32], index: 1, kind: input, shape index: {}]
  %s2 = inlined_call_operand.vmem [shape: bf16[384,32], index: 2, kind: input, shape index: {}]
  %s3 = inlined_call_operand.vmem [shape: f32[4,128], index: 3, kind: input, shape index: {}]
  %s4 = inlined_call_operand.hbm [shape: f32[16,32], index: 4, kind: output, shape index: {}]
  %s5 = sld [smem:[#allocation0]]
  $region26: #{transformer_decoder_layer.1} parent=0
    _
  %s7 = ssub.s32 1, %s5
  %s8 = scalar_select 0, %s7, %s5
  $region1: #{transformer_decoder_layer.1} parent=0
    #allocation2 [shape = 'u8[8192]{0}', space=vmem, size = 0x2000, scoped, tag = 'output window, operand 0, single buffered']
    #allocation3 [shape = 's32[1]{0}', space=sflag, size = 0x4, scoped, tag = 'scoped memory for transformer_decoder_layer.1']
    %9 = vsyncpa [#allocation3], 0
    // Predicated region
    $region2: #{transformer_decoder_layer.1} parent=1 // pred_check
      _
    $region3: #{transformer_decoder_layer.1} parent=1 // pred_check_branch
      %11 = sbr.rel (0) target = $region5
    $region4: #{transformer_decoder_layer.1} parent=1 // pred_region
      _
    $region5: #{transformer_decoder_layer.1} parent=1 // pred_fallthru
      _
    // Predicated region
    $region6: #{transformer_decoder_layer.1} parent=1 // pred_check
      _
    $region7: #{transformer_decoder_layer.1} parent=1 // pred_check_branch
      %13 = sbr.rel (0) target = $region9
    $region8: #{transformer_decoder_layer.1} parent=1 // pred_region
      _
    $region9: #{transformer_decoder_layer.1} parent=1 // pred_fallthru
      _
    // Predicated region
    $region10: #{transformer_decoder_layer.1} parent=1 // pred_check
      _
    $region11: #{transformer_decoder_layer.1} parent=1 // pred_check_branch
      %15 = sbr.rel (0) target = $region13
    $region12: #{transformer_decoder_layer.1} parent=1 // pred_region
      _
    $region13: #{transformer_decoder_layer.1} parent=1 // pred_fallthru
      _
    // Predicated region
    $region14: #{transformer_decoder_layer.1} parent=1 // pred_check
      _
    $region15: #{transformer_decoder_layer.1} parent=1 // pred_check_branch
      %17 = sbr.rel (0) target = $region17
    $region16: #{transformer_decoder_layer.1} parent=1 // pred_region
      _
    $region17: #{transformer_decoder_layer.1} parent=1 // pred_fallthru
      _
    %v19 = vld [vmem:[%s0] sm:$0xff]
    %v20 = vld [vmem:[%s0 + $0x8] sm:$0xff]
    %v21 = vld [vmem:[%s1] sm:$0xff]
    %v22 = vld [vmem:[%s1 + $0x8] sm:$0xff]
    %v23 = vld [vmem:[%s1 + $0x10] sm:$0xff]
    %v24 = vld [vmem:[%s2] sm:$0xf]
    %v25 = vld [vmem:[%s2 + $0x4] sm:$0xf]
    %v26 = vld [vmem:[%s2 + $0x8] sm:$0xf]
    %v27 = vld [vmem:[%s2 + $0xc] sm:$0xf]
    %v28 = vld [vmem:[%s2 + $0x10] sm:$0xf]
    %v29 = vld [vmem:[%s2 + $0x14] sm:$0xf]
    %v30 = vld [vmem:[%s2 + $0x18] sm:$0xf]
    %v31 = vld [vmem:[%s2 + $0x1c] sm:$0xf]
    %v32 = vld [vmem:[%s2 + $0x20] sm:$0xf]
    %v33 = vld [vmem:[%s2 + $0x24] sm:$0xf]
    %v34 = vld [vmem:[%s2 + $0x28] sm:$0xf]
    %v35 = vld [vmem:[%s2 + $0x2c] sm:$0xf]
    %v36 = vld [vmem:[%s2 + $0x30] sm:$0xf]
    %v37 = vld [vmem:[%s2 + $0x34] sm:$0xf]
    %v38 = vld [vmem:[%s2 + $0x38] sm:$0xf]
    %v39 = vld [vmem:[%s2 + $0x3c] sm:$0xf]
    %v40 = vld [vmem:[%s2 + $0x40] sm:$0xf]
    %v41 = vld [vmem:[%s2 + $0x44] sm:$0xf]
    %v42 = vld [vmem:[%s2 + $0x48] sm:$0xf]
    %v43 = vld [vmem:[%s2 + $0x4c] sm:$0xf]
    %v44 = vld [vmem:[%s2 + $0x50] sm:$0xf]
    %v45 = vld [vmem:[%s2 + $0x54] sm:$0xf]
    %v46 = vld [vmem:[%s2 + $0x58] sm:$0xf]
    %v47 = vld [vmem:[%s2 + $0x5c] sm:$0xf]
    %v48 = vld [vmem:[%s2 + $0x60] sm:$0xf]
    %v49 = vld [vmem:[%s2 + $0x64] sm:$0xf]
    %v50 = vld [vmem:[%s2 + $0x68] sm:$0xf]
    %v51 = vld [vmem:[%s2 + $0x6c] sm:$0xf]
    %v52 = vld [vmem:[%s2 + $0x70] sm:$0xf]
    %v53 = vld [vmem:[%s2 + $0x74] sm:$0xf]
    %v54 = vld [vmem:[%s2 + $0x78] sm:$0xf]
    %v55 = vld [vmem:[%s2 + $0x7c] sm:$0xf]
    %v56 = vld [vmem:[%s2 + $0x80] sm:$0xf]
    %v57 = vld [vmem:[%s2 + $0x84] sm:$0xf]
    %v58 = vld [vmem:[%s2 + $0x88] sm:$0xf]
    %v59 = vld [vmem:[%s2 + $0x8c] sm:$0xf]
    %v60 = vld [vmem:[%s2 + $0x90] sm:$0xf]
    %v61 = vld [vmem:[%s2 + $0x94] sm:$0xf]
    %v62 = vld [vmem:[%s2 + $0x98] sm:$0xf]
    %v63 = vld [vmem:[%s2 + $0x9c] sm:$0xf]
    %v64 = vld [vmem:[%s2 + $0xa0] sm:$0xf]
    %v65 = vld [vmem:[%s2 + $0xa4] sm:$0xf]
    %v66 = vld [vmem:[%s2 + $0xa8] sm:$0xf]
    %v67 = vld [vmem:[%s2 + $0xac] sm:$0xf]
    %v68 = vld [vmem:[%s2 + $0xb0] sm:$0xf]
    %v69 = vld [vmem:[%s2 + $0xb4] sm:$0xf]
    %v70 = vld [vmem:[%s2 + $0xb8] sm:$0xf]
    %v71 = vld [vmem:[%s2 + $0xbc] sm:$0xf]
    %v72 = vld [vmem:[%s3] sm:$0x1]
    %v73 = vld [vmem:[%s3 + $0x1] sm:$0x1]
    %v74 = vld [vmem:[%s3 + $0x2] sm:$0x1]
    %v75 = vld [vmem:[%s3 + $0x3] sm:$0x1]
    %v76 = vpack.c.bf16 %v20, %v19
    %v77 = vpack.c.bf16 %v22, %v21
    %v78 = vpack.c.bf16 %v23, %v23
    %v79 = vlaneseq
    %v80 = vshrl.u32 %v79, 7
    %v81 = vsub.s32 0, %v80
    %v82 = vrot.slane %v72, %v81
    %v87 = vunpack.c.l.b16 %v24
    %v88 = vunpack.c.l.b16 %v25
    %v89 = vunpack.c.l.b16 %v26
    %v90 = vunpack.c.l.b16 %v27
    %v91 = vpack.c.b16 %v88, %v87
    %v92 = vpack.c.b16 %v90, %v89
    %vm93 = vcmask 261120
    %v95 = vsel %vm93, %v76, 0
    %v98 = vsel %vm93, %v91, 0
    %v101 = vsel %vm93, %v92, 0
    %103 = vmatprep.subr.bf16.mxu0 0
    %104 = vmatpush1.bf16.xpose.msra.mxu0 %v98
    %105 = vmatprep.subr.bf16.mxu0 0
    %106 = vmatpush1.bf16.xpose.msra.mxu0 %v101
    %107 = vmatprep.subr.bf16.mxu0 0
    %108 = vmatpush1.bf16.xpose.msra.mxu0 0
    %109 = vmatprep.subr.bf16.mxu0 0
    %110 = vmatpush1.bf16.xpose.msra.mxu0 0
    %111 = vmatprep.subr.bf16.mxu0 0
    %112 = vmatpush1.bf16.xpose.msra.mxu0 0
    %113 = vmatprep.subr.bf16.mxu0 0
    %114 = vmatpush1.bf16.xpose.msra.mxu0 0
    %115 = vmatprep.subr.bf16.mxu0 0
    %116 = vmatpush1.bf16.xpose.msra.mxu0 0
    %117 = vmatprep.subr.bf16.mxu0 0
    %118 = vmatpush1.bf16.xpose.msra.mxu0 0
    %119 = vmatprep.subr.bf16.mxu0 0
    %120 = vmatpush1.bf16.xpose.msra.mxu0 0
    %121 = vmatprep.subr.bf16.mxu0 0
    %122 = vmatpush1.bf16.xpose.msra.mxu0 0
    %123 = vmatprep.subr.bf16.mxu0 0
    %124 = vmatpush1.bf16.xpose.msra.mxu0 0
    %125 = vmatprep.subr.bf16.mxu0 0
    %126 = vmatpush1.bf16.xpose.msra.mxu0 0
    %127 = vmatprep.subr.bf16.mxu0 0
    %128 = vmatpush1.bf16.xpose.msra.mxu0 0
    %129 = vmatprep.subr.bf16.mxu0 0
    %130 = vmatpush1.bf16.xpose.msra.mxu0 0
    %131 = vmatprep.subr.bf16.mxu0 0
    %132 = vmatpush1.bf16.xpose.msra.mxu0 0
    %133 = vmatprep.subr.bf16.mxu0 0
    %134 = vmatpush1.bf16.xpose.msra.mxu0 0
    %135 = vmatprep.mubr.bf16.mxu0 0
    %136 = vmatmul.mubr.bf16.gmra.mrb[0].mxu0 %v95
    %v137 = vpop.f32.mrb[0].mxu0
    %v138 = vadd.f32 %v82, %v137
    %v139 = vpop.f32.mrb[0].mxu0
    %v140 = vpop.f32.mrb[0].mxu0
    %v141 = vadd.f32 %v82, %v140
    %v142 = vpop.f32.mrb[0].mxu0
    %143 = vdwg.mxu0
    %v144 = vpack.c.bf16 %v141, %v138
    %v153 = vunpack.c.l.b16 %v28
    %v154 = vunpack.c.l.b16 %v29
    %v155 = vunpack.c.l.b16 %v30
    %v156 = vunpack.c.l.b16 %v31
    %v157 = vunpack.c.l.b16 %v32
    %v158 = vunpack.c.l.b16 %v33
    %v159 = vunpack.c.l.b16 %v34
    %v160 = vunpack.c.l.b16 %v35
    %v161 = vpack.c.b16 %v154, %v153
    %v162 = vpack.c.b16 %v156, %v155
    %v163 = vpack.c.b16 %v158, %v157
    %v164 = vpack.c.b16 %v160, %v159
    %v166 = vsel %vm93, %v161, 0
    %v169 = vsel %vm93, %v162, 0
    %v172 = vsel %vm93, %v163, 0
    %v175 = vsel %vm93, %v164, 0
    %v178 = vsel %vm93, %v77, 0
    %v181 = vsel %vm93, %v78, 0
    %183 = vmatprep.subr.bf16.mxu0 0
    %184 = vmatpush1.bf16.xpose.msra.mxu0 %v178
    %185 = vmatprep.subr.bf16.mxu0 0
    %186 = vmatpush1.bf16.xpose.msra.mxu0 %v181
    %187 = vmatprep.subr.bf16.mxu0 0
    %188 = vmatpush1.bf16.xpose.msra.mxu0 0
    %189 = vmatprep.subr.bf16.mxu0 0
    %190 = vmatpush1.bf16.xpose.msra.mxu0 0
    %191 = vmatprep.subr.bf16.mxu0 0
    %192 = vmatpush1.bf16.xpose.msra.mxu0 0
    %193 = vmatprep.subr.bf16.mxu0 0
    %194 = vmatpush1.bf16.xpose.msra.mxu0 0
    %195 = vmatprep.subr.bf16.mxu0 0
    %196 = vmatpush1.bf16.xpose.msra.mxu0 0
    %197 = vmatprep.subr.bf16.mxu0 0
    %198 = vmatpush1.bf16.xpose.msra.mxu0 0
    %199 = vmatprep.subr.bf16.mxu0 0
    %200 = vmatpush1.bf16.xpose.msra.mxu0 0
    %201 = vmatprep.subr.bf16.mxu0 0
    %202 = vmatpush1.bf16.xpose.msra.mxu0 0
    %203 = vmatprep.subr.bf16.mxu0 0
    %204 = vmatpush1.bf16.xpose.msra.mxu0 0
    %205 = vmatprep.subr.bf16.mxu0 0
    %206 = vmatpush1.bf16.xpose.msra.mxu0 0
    %207 = vmatprep.subr.bf16.mxu0 0
    %208 = vmatpush1.bf16.xpose.msra.mxu0 0
    %209 = vmatprep.subr.bf16.mxu0 0
    %210 = vmatpush1.bf16.xpose.msra.mxu0 0
    %211 = vmatprep.subr.bf16.mxu0 0
    %212 = vmatpush1.bf16.xpose.msra.mxu0 0
    %213 = vmatprep.subr.bf16.mxu0 0
    %214 = vmatpush1.bf16.xpose.msra.mxu0 0
    %215 = vmatprep.mubr.bf16.mxu0 0
    %216 = vmatmul.mubr.bf16.gmra.mrb[0].mxu0 %v166
    %v217 = vpop.f32.mrb[0].mxu0
    %v218 = vadd.f32 0.0, %v217
    %v219 = vpop.f32.mrb[0].mxu0
    %v220 = vpop.f32.mrb[0].mxu0
    %v221 = vadd.f32 0.0, %v220
    %v222 = vpop.f32.mrb[0].mxu0
    %223 = vmatprep.mubr.bf16.mxu0 0
    %224 = vmatmul.mubr.bf16.gmra.mrb[0].mxu0 %v169
    %v225 = vpop.f32.mrb[0].mxu0
    %v226 = vadd.f32 0.0, %v225
    %v227 = vpop.f32.mrb[0].mxu0
    %v228 = vpop.f32.mrb[0].mxu0
    %v229 = vadd.f32 0.0, %v228
    %v230 = vpop.f32.mrb[0].mxu0
    %231 = vmatprep.mubr.bf16.mxu0 0
    %232 = vmatmul.mubr.bf16.gmra.mrb[0].mxu0 %v172
    %v233 = vpop.f32.mrb[0].mxu0
    %v234 = vadd.f32 0.0, %v233
    %v235 = vpop.f32.mrb[0].mxu0
    %v236 = vpop.f32.mrb[0].mxu0
    %v237 = vadd.f32 0.0, %v236
    %v238 = vpop.f32.mrb[0].mxu0
    %239 = vmatprep.mubr.bf16.mxu0 0
    %240 = vmatmul.mubr.bf16.gmra.mrb[0].mxu0 %v175
    %v241 = vpop.f32.mrb[0].mxu0
    %v242 = vadd.f32 0.0, %v241
    %v243 = vpop.f32.mrb[0].mxu0
    %v244 = vpop.f32.mrb[0].mxu0
    %v245 = vadd.f32 0.0, %v244
    %v246 = vpop.f32.mrb[0].mxu0
    %247 = vdwg.mxu0
    %v248 = vpack.c.bf16 %v221, %v218
    %v249 = vpack.c.bf16 %v229, %v226
    %v250 = vpack.c.bf16 %v237, %v234
    %v251 = vpack.c.bf16 %v245, %v242
    %v252 = vlaneseq
    %v253 = vshrl.u32 %v252, 7
    %v254 = vadd.s32 %v253, 8
    %vm255 = vcmp.lt.s32.totalorder %v253, 0
    %v256 = vsub.s32 0, %v253
    %v257 = vsel %vm255, %v256, %v253
    %v258 = vshrl.u32 %v257, 1
    %v259 = vand.u32 %v257, 1
    %v260 = vsub.s32 0, %v259
    %v261 = vsel %vm255, %v260, %v259
    %vm262 = vcmp.lt.s32.totalorder %v254, 0
    %v263 = vsub.s32 0, %v254
    %v264 = vsel %vm262, %v263, %v254
    %v265 = vshrl.u32 %v264, 1
    %v266 = vand.u32 %v264, 1
    %v267 = vsub.s32 0, %v266
    %v268 = vsel %vm262, %v267, %v266
    %vm269 = vcmp.ne.s32.totalorder %v261, 0
    %vm270 = vcmp.ne.s32.totalorder %v268, 0
    %vm271 = vcmp.lt.s32.totalorder %v261, 0
    %vm272 = vcmp.lt.s32.totalorder %v268, 0
    %vm273 = vmand %vm271, %vm269
    %vm274 = vmand %vm272, %vm270
    %v275 = vadd.s32 %v261, 2
    %v276 = vadd.s32 %v268, 2
    %v277 = vsel %vm273, %v275, %v261
    %v278 = vsel %vm274, %v276, %v268
    %v279 = vlaneseq
    %v280 = vand.u32 %v279, 127
    %vm281 = vcmp.lt.s32.totalorder %v280, 0
    %v282 = vsub.s32 0, %v280
    %v283 = vsel %vm281, %v282, %v280
    %v284 = vshrl.u32 %v283, 1
    %v285 = vand.u32 %v283, 1
    %v286 = vsub.s32 0, %v285
    %v287 = vsel %vm281, %v286, %v285
    %vm288 = vcmp.ne.s32.totalorder %v287, 0
    %vm289 = vcmp.lt.s32.totalorder %v287, 0
    %vm290 = vmand %vm289, %vm288
    %v291 = vadd.s32 %v287, 2
    %v292 = vsel %vm290, %v291, %v287
    %vm293 = vcmp.eq.s32.totalorder %v277, %v292
    %vm294 = vcmp.eq.s32.totalorder %v278, %v292
    %vm295 = vcmask 64512
    %v297 = vsel %vm295, %v144, 0
    %vm299 = vcmask 1043456
    %v301 = vsel %vm299, %v248, 0
    %303 = vmatprep.subr.bf16.mxu0 0
    %304 = vmatpush1.bf16.msra.mxu0 %v301
    %305 = vmatprep.subr.bf16.mxu0 0
    %306 = vmatpush1.bf16.msra.mxu0 0
    %307 = vmatprep.subr.bf16.mxu0 0
    %308 = vmatpush1.bf16.msra.mxu0 0
    %309 = vmatprep.subr.bf16.mxu0 0
    %310 = vmatpush1.bf16.msra.mxu0 0
    %311 = vmatprep.subr.bf16.mxu0 0
    %312 = vmatpush1.bf16.msra.mxu0 0
    %313 = vmatprep.subr.bf16.mxu0 0
    %314 = vmatpush1.bf16.msra.mxu0 0
    %315 = vmatprep.subr.bf16.mxu0 0
    %316 = vmatpush1.bf16.msra.mxu0 0
    %317 = vmatprep.subr.bf16.mxu0 0
    %318 = vmatpush1.bf16.msra.mxu0 0
    %319 = vmatprep.subr.bf16.mxu0 0
    %320 = vmatpush1.bf16.msra.mxu0 0
    %321 = vmatprep.subr.bf16.mxu0 0
    %322 = vmatpush1.bf16.msra.mxu0 0
    %323 = vmatprep.subr.bf16.mxu0 0
    %324 = vmatpush1.bf16.msra.mxu0 0
    %325 = vmatprep.subr.bf16.mxu0 0
    %326 = vmatpush1.bf16.msra.mxu0 0
    %327 = vmatprep.subr.bf16.mxu0 0
    %328 = vmatpush1.bf16.msra.mxu0 0
    %329 = vmatprep.subr.bf16.mxu0 0
    %330 = vmatpush1.bf16.msra.mxu0 0
    %331 = vmatprep.subr.bf16.mxu0 0
    %332 = vmatpush1.bf16.msra.mxu0 0
    %333 = vmatprep.subr.bf16.mxu0 0
    %334 = vmatpush1.bf16.msra.mxu0 0
    %335 = vmatprep.mubr.bf16.mxu0 0
    %336 = vmatmul.mubr.bf16.gmra.mrb[0].mxu0 %v297
    %v337 = vpop.f32.mrb[0].mxu0
    %v338 = vadd.f32 0.0, %v337
    %v339 = vpop.f32.mrb[0].mxu0
    %v340 = vpop.f32.mrb[0].mxu0
    %v341 = vadd.f32 0.0, %v340
    %v342 = vpop.f32.mrb[0].mxu0
    %343 = vdwg.mxu0
    %v344 = vsel %vm293, %v338, -1e+30
    %v345 = vsel %vm294, %v341, -1e+30
    %vm346 = vcmask 195584
    %v347 = vsel %vm346, %v344, -inf
    %348 = vmax.xlane.f32.xlu0 %v347
    %v349 = vpop.xlane.xlu0 %348
    %v350 = vsel %vm346, %v345, -inf
    %351 = vmax.xlane.f32.xlu0 %v350
    %v352 = vpop.xlane.xlu0 %351
    %v353 = vsub.f32 %v344, %v349
    %v354 = vsub.f32 %v345, %v352
    %v355 = vmul.f32 %v353, 1.442695
    %v356 = vpow.pop %v355
    %v357 = vmul.f32 %v354, 1.442695
    %v358 = vpow.pop %v357
    %v359 = vsel %vm346, %v356, 0.0
    %360 = vadd.xlane.f32.xlu0 %v359
    %v361 = vpop.xlane.xlu0 %360
    %v362 = vsel %vm346, %v358, 0.0
    %363 = vadd.xlane.f32.xlu0 %v362
    %v364 = vpop.xlane.xlu0 %363
    %v365 = vrcp.pop %v361
    %v366 = vrcp.pop %v364
    %v367 = vmul.f32 %v356, %v365
    %v368 = vmul.f32 %v358, %v366
    %v369 = vpack.c.bf16 %v368, %v367
    %v371 = vsel %vm346, %v250, 0
    %v374 = vsel %vm346, %v369, 0
    %376 = vmatprep.subr.bf16.mxu0 0
    %377 = vmatpush1.bf16.xpose.msra.mxu0 %v374
    %378 = vmatprep.subr.bf16.mxu0 0
    %379 = vmatpush1.bf16.xpose.msra.mxu0 0
    %380 = vmatprep.subr.bf16.mxu0 0
    %381 = vmatpush1.bf16.xpose.msra.mxu0 0
    %382 = vmatprep.subr.bf16.mxu0 0
    %383 = vmatpush1.bf16.xpose.msra.mxu0 0
    %384 = vmatprep.subr.bf16.mxu0 0
    %385 = vmatpush1.bf16.xpose.msra.mxu0 0
    %386 = vmatprep.subr.bf16.mxu0 0
    %387 = vmatpush1.bf16.xpose.msra.mxu0 0
    %388 = vmatprep.subr.bf16.mxu0 0
    %389 = vmatpush1.bf16.xpose.msra.mxu0 0
    %390 = vmatprep.subr.bf16.mxu0 0
    %391 = vmatpush1.bf16.xpose.msra.mxu0 0
    %392 = vmatprep.subr.bf16.mxu0 0
    %393 = vmatpush1.bf16.xpose.msra.mxu0 0
    %394 = vmatprep.subr.bf16.mxu0 0
    %395 = vmatpush1.bf16.xpose.msra.mxu0 0
    %396 = vmatprep.subr.bf16.mxu0 0
    %397 = vmatpush1.bf16.xpose.msra.mxu0 0
    %398 = vmatprep.subr.bf16.mxu0 0
    %399 = vmatpush1.bf16.xpose.msra.mxu0 0
    %400 = vmatprep.subr.bf16.mxu0 0
    %401 = vmatpush1.bf16.xpose.msra.mxu0 0
    %402 = vmatprep.subr.bf16.mxu0 0
    %403 = vmatpush1.bf16.xpose.msra.mxu0 0
    %404 = vmatprep.subr.bf16.mxu0 0
    %405 = vmatpush1.bf16.xpose.msra.mxu0 0
    %406 = vmatprep.subr.bf16.mxu0 0
    %407 = vmatpush1.bf16.xpose.msra.mxu0 0
    %408 = vmatprep.mubr.bf16.mxu0 0
    %409 = vmatmul.mubr.bf16.gmra.mrb[0].mxu0 %v371
    %v410 = vpop.f32.mrb[0].mxu0
    %v411 = vadd.f32 0.0, %v410
    %v412 = vpop.f32.mrb[0].mxu0
    %v413 = vpop.f32.mrb[0].mxu0
    %v414 = vpop.f32.mrb[0].mxu0
    %415 = vdwg.mxu0
    %417 = vrot.lane.b32.xlu0 %v144, 120
    %v418 = vpop.permute.xlu0 %417
    %v420 = vrot.slane %v248, 4
    %v422 = vsel %vm295, %v418, 0
    %v425 = vsel %vm299, %v420, 0
    %427 = vmatprep.subr.bf16.mxu0 0
    %428 = vmatpush1.bf16.msra.mxu0 %v425
    %429 = vmatprep.subr.bf16.mxu0 0
    %430 = vmatpush1.bf16.msra.mxu0 0
    %431 = vmatprep.subr.bf16.mxu0 0
    %432 = vmatpush1.bf16.msra.mxu0 0
    %433 = vmatprep.subr.bf16.mxu0 0
    %434 = vmatpush1.bf16.msra.mxu0 0
    %435 = vmatprep.subr.bf16.mxu0 0
    %436 = vmatpush1.bf16.msra.mxu0 0
    %437 = vmatprep.subr.bf16.mxu0 0
    %438 = vmatpush1.bf16.msra.mxu0 0
    %439 = vmatprep.subr.bf16.mxu0 0
    %440 = vmatpush1.bf16.msra.mxu0 0
    %441 = vmatprep.subr.bf16.mxu0 0
    %442 = vmatpush1.bf16.msra.mxu0 0
    %443 = vmatprep.subr.bf16.mxu0 0
    %444 = vmatpush1.bf16.msra.mxu0 0
    %445 = vmatprep.subr.bf16.mxu0 0
    %446 = vmatpush1.bf16.msra.mxu0 0
    %447 = vmatprep.subr.bf16.mxu0 0
    %448 = vmatpush1.bf16.msra.mxu0 0
    %449 = vmatprep.subr.bf16.mxu0 0
    %450 = vmatpush1.bf16.msra.mxu0 0
    %451 = vmatprep.subr.bf16.mxu0 0
    %452 = vmatpush1.bf16.msra.mxu0 0
    %453 = vmatprep.subr.bf16.mxu0 0
    %454 = vmatpush1.bf16.msra.mxu0 0
    %455 = vmatprep.subr.bf16.mxu0 0
    %456 = vmatpush1.bf16.msra.mxu0 0
    %457 = vmatprep.subr.bf16.mxu0 0
    %458 = vmatpush1.bf16.msra.mxu0 0
    %459 = vmatprep.mubr.bf16.mxu0 0
    %460 = vmatmul.mubr.bf16.gmra.mrb[0].mxu0 %v422
    %v461 = vpop.f32.mrb[0].mxu0
    %v462 = vadd.f32 0.0, %v461
    %v463 = vpop.f32.mrb[0].mxu0
    %v464 = vpop.f32.mrb[0].mxu0
    %v465 = vadd.f32 0.0, %v464
    %v466 = vpop.f32.mrb[0].mxu0
    %467 = vdwg.mxu0
    %v468 = vsel %vm293, %v462, -1e+30
    %v469 = vsel %vm294, %v465, -1e+30
    %v470 = vsel %vm346, %v468, -inf
    %471 = vmax.xlane.f32.xlu0 %v470
    %v472 = vpop.xlane.xlu0 %471
    %v473 = vsel %vm346, %v469, -inf
    %474 = vmax.xlane.f32.xlu0 %v473
    %v475 = vpop.xlane.xlu0 %474
    %v476 = vsub.f32 %v468, %v472
    %v477 = vsub.f32 %v469, %v475
    %v478 = vmul.f32 %v476, 1.442695
    %v479 = vpow.pop %v478
    %v480 = vmul.f32 %v477, 1.442695
    %v481 = vpow.pop %v480
    %v482 = vsel %vm346, %v479, 0.0
    %483 = vadd.xlane.f32.xlu0 %v482
    %v484 = vpop.xlane.xlu0 %483
    %v485 = vsel %vm346, %v481, 0.0
    %486 = vadd.xlane.f32.xlu0 %v485
    %v487 = vpop.xlane.xlu0 %486
    %v488 = vrcp.pop %v484
    %v489 = vrcp.pop %v487
    %v490 = vmul.f32 %v479, %v488
    %v491 = vmul.f32 %v481, %v489
    %v492 = vpack.c.bf16 %v491, %v490
    %v494 = vrot.slane %v250, 4
    %v496 = vsel %vm346, %v494, 0
    %v499 = vsel %vm346, %v492, 0
    %501 = vmatprep.subr.bf16.mxu0 0
    %502 = vmatpush1.bf16.xpose.msra.mxu0 %v499
    %503 = vmatprep.subr.bf16.mxu0 0
    %504 = vmatpush1.bf16.xpose.msra.mxu0 0
    %505 = vmatprep.subr.bf16.mxu0 0
    %506 = vmatpush1.bf16.xpose.msra.mxu0 0
    %507 = vmatprep.subr.bf16.mxu0 0
    %508 = vmatpush1.bf16.xpose.msra.mxu0 0
    %509 = vmatprep.subr.bf16.mxu0 0
    %510 = vmatpush1.bf16.xpose.msra.mxu0 0
    %511 = vmatprep.subr.bf16.mxu0 0
    %512 = vmatpush1.bf16.xpose.msra.mxu0 0
    %513 = vmatprep.subr.bf16.mxu0 0
    %514 = vmatpush1.bf16.xpose.msra.mxu0 0
    %515 = vmatprep.subr.bf16.mxu0 0
    %516 = vmatpush1.bf16.xpose.msra.mxu0 0
    %517 = vmatprep.subr.bf16.mxu0 0
    %518 = vmatpush1.bf16.xpose.msra.mxu0 0
    %519 = vmatprep.subr.bf16.mxu0 0
    %520 = vmatpush1.bf16.xpose.msra.mxu0 0
    %521 = vmatprep.subr.bf16.mxu0 0
    %522 = vmatpush1.bf16.xpose.msra.mxu0 0
    %523 = vmatprep.subr.bf16.mxu0 0
    %524 = vmatpush1.bf16.xpose.msra.mxu0 0
    %525 = vmatprep.subr.bf16.mxu0 0
    %526 = vmatpush1.bf16.xpose.msra.mxu0 0
    %527 = vmatprep.subr.bf16.mxu0 0
    %528 = vmatpush1.bf16.xpose.msra.mxu0 0
    %529 = vmatprep.subr.bf16.mxu0 0
    %530 = vmatpush1.bf16.xpose.msra.mxu0 0
    %531 = vmatprep.subr.bf16.mxu0 0
    %532 = vmatpush1.bf16.xpose.msra.mxu0 0
    %533 = vmatprep.mubr.bf16.mxu0 0
    %534 = vmatmul.mubr.bf16.gmra.mrb[0].mxu0 %v496
    %v535 = vpop.f32.mrb[0].mxu0
    %v536 = vadd.f32 0.0, %v535
    %v537 = vpop.f32.mrb[0].mxu0
    %v538 = vpop.f32.mrb[0].mxu0
    %v539 = vpop.f32.mrb[0].mxu0
    %540 = vdwg.mxu0
    %541 = vrot.lane.b32.xlu0 %v144, 112
    %v542 = vpop.permute.xlu0 %541
    %v544 = vsel %vm295, %v542, 0
    %v547 = vsel %vm299, %v249, 0
    %549 = vmatprep.subr.bf16.mxu0 0
    %550 = vmatpush1.bf16.msra.mxu0 %v547
    %551 = vmatprep.subr.bf16.mxu0 0
    %552 = vmatpush1.bf16.msra.mxu0 0
    %553 = vmatprep.subr.bf16.mxu0 0
    %554 = vmatpush1.bf16.msra.mxu0 0
    %555 = vmatprep.subr.bf16.mxu0 0
    %556 = vmatpush1.bf16.msra.mxu0 0
    %557 = vmatprep.subr.bf16.mxu0 0
    %558 = vmatpush1.bf16.msra.mxu0 0
    %559 = vmatprep.subr.bf16.mxu0 0
    %560 = vmatpush1.bf16.msra.mxu0 0
    %561 = vmatprep.subr.bf16.mxu0 0
    %562 = vmatpush1.bf16.msra.mxu0 0
    %563 = vmatprep.subr.bf16.mxu0 0
    %564 = vmatpush1.bf16.msra.mxu0 0
    %565 = vmatprep.subr.bf16.mxu0 0
    %566 = vmatpush1.bf16.msra.mxu0 0
    %567 = vmatprep.subr.bf16.mxu0 0
    %568 = vmatpush1.bf16.msra.mxu0 0
    %569 = vmatprep.subr.bf16.mxu0 0
    %570 = vmatpush1.bf16.msra.mxu0 0
    %571 = vmatprep.subr.bf16.mxu0 0
    %572 = vmatpush1.bf16.msra.mxu0 0
    %573 = vmatprep.subr.bf16.mxu0 0
    %574 = vmatpush1.bf16.msra.mxu0 0
    %575 = vmatprep.subr.bf16.mxu0 0
    %576 = vmatpush1.bf16.msra.mxu0 0
    %577 = vmatprep.subr.bf16.mxu0 0
    %578 = vmatpush1.bf16.msra.mxu0 0
    %579 = vmatprep.subr.bf16.mxu0 0
    %580 = vmatpush1.bf16.msra.mxu0 0
    %581 = vmatprep.mubr.bf16.mxu0 0
    %582 = vmatmul.mubr.bf16.gmra.mrb[0].mxu0 %v544
    %v583 = vpop.f32.mrb[0].mxu0
    %v584 = vadd.f32 0.0, %v583
    %v585 = vpop.f32.mrb[0].mxu0
    %v586 = vpop.f32.mrb[0].mxu0
    %v587 = vadd.f32 0.0, %v586
    %v588 = vpop.f32.mrb[0].mxu0
    %589 = vdwg.mxu0
    %v590 = vsel %vm293, %v584, -1e+30
    %v591 = vsel %vm294, %v587, -1e+30
    %v592 = vsel %vm346, %v590, -inf
    %593 = vmax.xlane.f32.xlu0 %v592
    %v594 = vpop.xlane.xlu0 %593
    %v595 = vsel %vm346, %v591, -inf
    %596 = vmax.xlane.f32.xlu0 %v595
    %v597 = vpop.xlane.xlu0 %596
    %v598 = vsub.f32 %v590, %v594
    %v599 = vsub.f32 %v591, %v597
    %v600 = vmul.f32 %v598, 1.442695
    %v601 = vpow.pop %v600
    %v602 = vmul.f32 %v599, 1.442695
    %v603 = vpow.pop %v602
    %v604 = vsel %vm346, %v601, 0.0
    %605 = vadd.xlane.f32.xlu0 %v604
    %v606 = vpop.xlane.xlu0 %605
    %v607 = vsel %vm346, %v603, 0.0
    %608 = vadd.xlane.f32.xlu0 %v607
    %v609 = vpop.xlane.xlu0 %608
    %v610 = vrcp.pop %v606
    %v611 = vrcp.pop %v609
    %v612 = vmul.f32 %v601, %v610
    %v613 = vmul.f32 %v603, %v611
    %v614 = vpack.c.bf16 %v613, %v612
    %v616 = vsel %vm346, %v251, 0
    %v619 = vsel %vm346, %v614, 0
    %621 = vmatprep.subr.bf16.mxu0 0
    %622 = vmatpush1.bf16.xpose.msra.mxu0 %v619
    %623 = vmatprep.subr.bf16.mxu0 0
    %624 = vmatpush1.bf16.xpose.msra.mxu0 0
    %625 = vmatprep.subr.bf16.mxu0 0
    %626 = vmatpush1.bf16.xpose.msra.mxu0 0
    %627 = vmatprep.subr.bf16.mxu0 0
    %628 = vmatpush1.bf16.xpose.msra.mxu0 0
    %629 = vmatprep.subr.bf16.mxu0 0
    %630 = vmatpush1.bf16.xpose.msra.mxu0 0
    %631 = vmatprep.subr.bf16.mxu0 0
    %632 = vmatpush1.bf16.xpose.msra.mxu0 0
    %633 = vmatprep.subr.bf16.mxu0 0
    %634 = vmatpush1.bf16.xpose.msra.mxu0 0
    %635 = vmatprep.subr.bf16.mxu0 0
    %636 = vmatpush1.bf16.xpose.msra.mxu0 0
    %637 = vmatprep.subr.bf16.mxu0 0
    %638 = vmatpush1.bf16.xpose.msra.mxu0 0
    %639 = vmatprep.subr.bf16.mxu0 0
    %640 = vmatpush1.bf16.xpose.msra.mxu0 0
    %641 = vmatprep.subr.bf16.mxu0 0
    %642 = vmatpush1.bf16.xpose.msra.mxu0 0
    %643 = vmatprep.subr.bf16.mxu0 0
    %644 = vmatpush1.bf16.xpose.msra.mxu0 0
    %645 = vmatprep.subr.bf16.mxu0 0
    %646 = vmatpush1.bf16.xpose.msra.mxu0 0
    %647 = vmatprep.subr.bf16.mxu0 0
    %648 = vmatpush1.bf16.xpose.msra.mxu0 0
    %649 = vmatprep.subr.bf16.mxu0 0
    %650 = vmatpush1.bf16.xpose.msra.mxu0 0
    %651 = vmatprep.subr.bf16.mxu0 0
    %652 = vmatpush1.bf16.xpose.msra.mxu0 0
    %653 = vmatprep.mubr.bf16.mxu0 0
    %654 = vmatmul.mubr.bf16.gmra.mrb[0].mxu0 %v616
    %v655 = vpop.f32.mrb[0].mxu0
    %v656 = vadd.f32 0.0, %v655
    %v657 = vpop.f32.mrb[0].mxu0
    %v658 = vpop.f32.mrb[0].mxu0
    %v659 = vpop.f32.mrb[0].mxu0
    %660 = vdwg.mxu0
    %661 = vrot.lane.b32.xlu0 %v144, 104
    %v662 = vpop.permute.xlu0 %661
    %v664 = vrot.slane %v249, 4
    %v666 = vsel %vm295, %v662, 0
    %v669 = vsel %vm299, %v664, 0
    %671 = vmatprep.subr.bf16.mxu0 0
    %672 = vmatpush1.bf16.msra.mxu0 %v669
    %673 = vmatprep.subr.bf16.mxu0 0
    %674 = vmatpush1.bf16.msra.mxu0 0
    %675 = vmatprep.subr.bf16.mxu0 0
    %676 = vmatpush1.bf16.msra.mxu0 0
    %677 = vmatprep.subr.bf16.mxu0 0
    %678 = vmatpush1.bf16.msra.mxu0 0
    %679 = vmatprep.subr.bf16.mxu0 0
    %680 = vmatpush1.bf16.msra.mxu0 0
    %681 = vmatprep.subr.bf16.mxu0 0
    %682 = vmatpush1.bf16.msra.mxu0 0
    %683 = vmatprep.subr.bf16.mxu0 0
    %684 = vmatpush1.bf16.msra.mxu0 0
    %685 = vmatprep.subr.bf16.mxu0 0
    %686 = vmatpush1.bf16.msra.mxu0 0
    %687 = vmatprep.subr.bf16.mxu0 0
    %688 = vmatpush1.bf16.msra.mxu0 0
    %689 = vmatprep.subr.bf16.mxu0 0
    %690 = vmatpush1.bf16.msra.mxu0 0
    %691 = vmatprep.subr.bf16.mxu0 0
    %692 = vmatpush1.bf16.msra.mxu0 0
    %693 = vmatprep.subr.bf16.mxu0 0
    %694 = vmatpush1.bf16.msra.mxu0 0
    %695 = vmatprep.subr.bf16.mxu0 0
    %696 = vmatpush1.bf16.msra.mxu0 0
    %697 = vmatprep.subr.bf16.mxu0 0
    %698 = vmatpush1.bf16.msra.mxu0 0
    %699 = vmatprep.subr.bf16.mxu0 0
    %700 = vmatpush1.bf16.msra.mxu0 0
    %701 = vmatprep.subr.bf16.mxu0 0
    %702 = vmatpush1.bf16.msra.mxu0 0
    %703 = vmatprep.mubr.bf16.mxu0 0
    %704 = vmatmul.mubr.bf16.gmra.mrb[0].mxu0 %v666
    %v705 = vpop.f32.mrb[0].mxu0
    %v706 = vadd.f32 0.0, %v705
    %v707 = vpop.f32.mrb[0].mxu0
    %v708 = vpop.f32.mrb[0].mxu0
    %v709 = vadd.f32 0.0, %v708
    %v710 = vpop.f32.mrb[0].mxu0
    %711 = vdwg.mxu0
    %v712 = vsel %vm293, %v706, -1e+30
    %v713 = vsel %vm294, %v709, -1e+30
    %v714 = vsel %vm346, %v712, -inf
    %715 = vmax.xlane.f32.xlu0 %v714
    %v716 = vpop.xlane.xlu0 %715
    %v717 = vsel %vm346, %v713, -inf
    %718 = vmax.xlane.f32.xlu0 %v717
    %v719 = vpop.xlane.xlu0 %718
    %v720 = vsub.f32 %v712, %v716
    %v721 = vsub.f32 %v713, %v719
    %v722 = vmul.f32 %v720, 1.442695
    %v723 = vpow.pop %v722
    %v724 = vmul.f32 %v721, 1.442695
    %v725 = vpow.pop %v724
    %v726 = vsel %vm346, %v723, 0.0
    %727 = vadd.xlane.f32.xlu0 %v726
    %v728 = vpop.xlane.xlu0 %727
    %v729 = vsel %vm346, %v725, 0.0
    %730 = vadd.xlane.f32.xlu0 %v729
    %v731 = vpop.xlane.xlu0 %730
    %v732 = vrcp.pop %v728
    %v733 = vrcp.pop %v731
    %v734 = vmul.f32 %v723, %v732
    %v735 = vmul.f32 %v725, %v733
    %v736 = vpack.c.bf16 %v735, %v734
    %v738 = vrot.slane %v251, 4
    %v740 = vsel %vm346, %v738, 0
    %v743 = vsel %vm346, %v736, 0
    %745 = vmatprep.subr.bf16.mxu0 0
    %746 = vmatpush1.bf16.xpose.msra.mxu0 %v743
    %747 = vmatprep.subr.bf16.mxu0 0
    %748 = vmatpush1.bf16.xpose.msra.mxu0 0
    %749 = vmatprep.subr.bf16.mxu0 0
    %750 = vmatpush1.bf16.xpose.msra.mxu0 0
    %751 = vmatprep.subr.bf16.mxu0 0
    %752 = vmatpush1.bf16.xpose.msra.mxu0 0
    %753 = vmatprep.subr.bf16.mxu0 0
    %754 = vmatpush1.bf16.xpose.msra.mxu0 0
    %755 = vmatprep.subr.bf16.mxu0 0
    %756 = vmatpush1.bf16.xpose.msra.mxu0 0
    %757 = vmatprep.subr.bf16.mxu0 0
    %758 = vmatpush1.bf16.xpose.msra.mxu0 0
    %759 = vmatprep.subr.bf16.mxu0 0
    %760 = vmatpush1.bf16.xpose.msra.mxu0 0
    %761 = vmatprep.subr.bf16.mxu0 0
    %762 = vmatpush1.bf16.xpose.msra.mxu0 0
    %763 = vmatprep.subr.bf16.mxu0 0
    %764 = vmatpush1.bf16.xpose.msra.mxu0 0
    %765 = vmatprep.subr.bf16.mxu0 0
    %766 = vmatpush1.bf16.xpose.msra.mxu0 0
    %767 = vmatprep.subr.bf16.mxu0 0
    %768 = vmatpush1.bf16.xpose.msra.mxu0 0
    %769 = vmatprep.subr.bf16.mxu0 0
    %770 = vmatpush1.bf16.xpose.msra.mxu0 0
    %771 = vmatprep.subr.bf16.mxu0 0
    %772 = vmatpush1.bf16.xpose.msra.mxu0 0
    %773 = vmatprep.subr.bf16.mxu0 0
    %774 = vmatpush1.bf16.xpose.msra.mxu0 0
    %775 = vmatprep.subr.bf16.mxu0 0
    %776 = vmatpush1.bf16.xpose.msra.mxu0 0
    %777 = vmatprep.mubr.bf16.mxu0 0
    %778 = vmatmul.mubr.bf16.gmra.mrb[0].mxu0 %v740
    %v779 = vpop.f32.mrb[0].mxu0
    %v780 = vadd.f32 0.0, %v779
    %v781 = vpop.f32.mrb[0].mxu0
    %v782 = vpop.f32.mrb[0].mxu0
    %v783 = vpop.f32.mrb[0].mxu0
    %784 = vdwg.mxu0
    %v785 = vpack.c.bf16 %v536, %v411
    %v786 = vpack.c.bf16 %v780, %v656
    %v787 = vlaneseq
    %v788 = vshrl.u32 %v787, 7
    %v789 = vsub.s32 0, %v788
    %v790 = vrot.slane %v73, %v789
    %791 = vxpose.xlu0.c.b16.start [1/8] %v785, 128
    %792 = vxpose.xlu0.c.b16.cont [2/8] %v786, 128
    %793 = vxpose.xlu0.c.b16.cont [3/8] 0, 128
    %794 = vxpose.xlu0.c.b16.cont [4/8] 0, 128
    %795 = vxpose.xlu0.c.b16.cont [5/8] 0, 128
    %796 = vxpose.xlu0.c.b16.cont [6/8] 0, 128
    %797 = vxpose.xlu0.c.b16.cont [7/8] 0, 128
    %798 = vxpose.xlu0.c.b16.end [8/8] 0, 128
    %v799 = vpop.trf.xlu0
    %v800 = vpop.trf.xlu0
    %v801 = vpop.trf.xlu0
    %v802 = vpop.trf.xlu0
    %v803 = vpop.trf.xlu0
    %v804 = vpop.trf.xlu0
    %v805 = vpop.trf.xlu0
    %v806 = vpop.trf.xlu0
    %v811 = vunpack.c.l.b16 %v36
    %v812 = vunpack.c.l.b16 %v37
    %v813 = vunpack.c.l.b16 %v38
    %v814 = vunpack.c.l.b16 %v39
    %v815 = vpack.c.b16 %v812, %v811
    %v816 = vpack.c.b16 %v814, %v813
    %v818 = vsel %vm93, %v799, 0
    %v821 = vsel %vm93, %v815, 0
    %v824 = vsel %vm93, %v816, 0
    %826 = vmatprep.subr.bf16.mxu0 0
    %827 = vmatpush1.bf16.xpose.msra.mxu0 %v821
    %828 = vmatprep.subr.bf16.mxu0 0
    %829 = vmatpush1.bf16.xpose.msra.mxu0 %v824
    %830 = vmatprep.subr.bf16.mxu0 0
    %831 = vmatpush1.bf16.xpose.msra.mxu0 0
    %832 = vmatprep.subr.bf16.mxu0 0
    %833 = vmatpush1.bf16.xpose.msra.mxu0 0
    %834 = vmatprep.subr.bf16.mxu0 0
    %835 = vmatpush1.bf16.xpose.msra.mxu0 0
    %836 = vmatprep.subr.bf16.mxu0 0
    %837 = vmatpush1.bf16.xpose.msra.mxu0 0
    %838 = vmatprep.subr.bf16.mxu0 0
    %839 = vmatpush1.bf16.xpose.msra.mxu0 0
    %840 = vmatprep.subr.bf16.mxu0 0
    %841 = vmatpush1.bf16.xpose.msra.mxu0 0
    %842 = vmatprep.subr.bf16.mxu0 0
    %843 = vmatpush1.bf16.xpose.msra.mxu0 0
    %844 = vmatprep.subr.bf16.mxu0 0
    %845 = vmatpush1.bf16.xpose.msra.mxu0 0
    %846 = vmatprep.subr.bf16.mxu0 0
    %847 = vmatpush1.bf16.xpose.msra.mxu0 0
    %848 = vmatprep.subr.bf16.mxu0 0
    %849 = vmatpush1.bf16.xpose.msra.mxu0 0
    %850 = vmatprep.subr.bf16.mxu0 0
    %851 = vmatpush1.bf16.xpose.msra.mxu0 0
    %852 = vmatprep.subr.bf16.mxu0 0
    %853 = vmatpush1.bf16.xpose.msra.mxu0 0
    %854 = vmatprep.subr.bf16.mxu0 0
    %855 = vmatpush1.bf16.xpose.msra.mxu0 0
    %856 = vmatprep.subr.bf16.mxu0 0
    %857 = vmatpush1.bf16.xpose.msra.mxu0 0
    %858 = vmatprep.mubr.bf16.mxu0 0
    %859 = vmatmul.mubr.bf16.gmra.mrb[0].mxu0 %v818
    %v860 = vpop.f32.mrb[0].mxu0
    %v861 = vadd.f32 %v790, %v860
    %v862 = vpop.f32.mrb[0].mxu0
    %v863 = vpop.f32.mrb[0].mxu0
    %v864 = vadd.f32 %v790, %v863
    %v865 = vpop.f32.mrb[0].mxu0
    %866 = vdwg.mxu0
    %v867 = vpack.c.bf16 %v864, %v861
    %v868 = vlaneseq
    %v869 = vshrl.u32 %v868, 7
    %v870 = vsub.s32 0, %v869
    %v871 = vrot.slane %v74, %v870
    %v888 = vunpack.c.l.b16 %v40
    %v889 = vunpack.c.l.b16 %v41
    %v890 = vunpack.c.l.b16 %v42
    %v891 = vunpack.c.l.b16 %v43
    %v892 = vunpack.c.l.b16 %v44
    %v893 = vunpack.c.l.b16 %v45
    %v894 = vunpack.c.l.b16 %v46
    %v895 = vunpack.c.l.b16 %v47
    %v896 = vunpack.c.l.b16 %v48
    %v897 = vunpack.c.l.b16 %v49
    %v898 = vunpack.c.l.b16 %v50
    %v899 = vunpack.c.l.b16 %v51
    %v900 = vunpack.c.l.b16 %v52
    %v901 = vunpack.c.l.b16 %v53
    %v902 = vunpack.c.l.b16 %v54
    %v903 = vunpack.c.l.b16 %v55
    %v904 = vpack.c.b16 %v889, %v888
    %v905 = vpack.c.b16 %v891, %v890
    %v906 = vpack.c.b16 %v893, %v892
    %v907 = vpack.c.b16 %v895, %v894
    %v908 = vpack.c.b16 %v897, %v896
    %v909 = vpack.c.b16 %v899, %v898
    %v910 = vpack.c.b16 %v901, %v900
    %v911 = vpack.c.b16 %v903, %v902
    %v913 = vsel %vm93, %v867, 0
    %v916 = vsel %vm93, %v904, 0
    %v919 = vsel %vm93, %v905, 0
    %v922 = vsel %vm93, %v906, 0
    %v925 = vsel %vm93, %v907, 0
    %v928 = vsel %vm93, %v908, 0
    %v931 = vsel %vm93, %v909, 0
    %v934 = vsel %vm93, %v910, 0
    %v937 = vsel %vm93, %v911, 0
    %939 = vmatprep.subr.bf16.mxu0 0
    %940 = vmatpush1.bf16.xpose.msra.mxu0 %v916
    %941 = vmatprep.subr.bf16.mxu0 0
    %942 = vmatpush1.bf16.xpose.msra.mxu0 %v919
    %943 = vmatprep.subr.bf16.mxu0 0
    %944 = vmatpush1.bf16.xpose.msra.mxu0 %v922
    %945 = vmatprep.subr.bf16.mxu0 0
    %946 = vmatpush1.bf16.xpose.msra.mxu0 %v925
    %947 = vmatprep.subr.bf16.mxu0 0
    %948 = vmatpush1.bf16.xpose.msra.mxu0 %v928
    %949 = vmatprep.subr.bf16.mxu0 0
    %950 = vmatpush1.bf16.xpose.msra.mxu0 %v931
    %951 = vmatprep.subr.bf16.mxu0 0
    %952 = vmatpush1.bf16.xpose.msra.mxu0 %v934
    %953 = vmatprep.subr.bf16.mxu0 0
    %954 = vmatpush1.bf16.xpose.msra.mxu0 %v937
    %955 = vmatprep.subr.bf16.mxu0 0
    %956 = vmatpush1.bf16.xpose.msra.mxu0 0
    %957 = vmatprep.subr.bf16.mxu0 0
    %958 = vmatpush1.bf16.xpose.msra.mxu0 0
    %959 = vmatprep.subr.bf16.mxu0 0
    %960 = vmatpush1.bf16.xpose.msra.mxu0 0
    %961 = vmatprep.subr.bf16.mxu0 0
    %962 = vmatpush1.bf16.xpose.msra.mxu0 0
    %963 = vmatprep.subr.bf16.mxu0 0
    %964 = vmatpush1.bf16.xpose.msra.mxu0 0
    %965 = vmatprep.subr.bf16.mxu0 0
    %966 = vmatpush1.bf16.xpose.msra.mxu0 0
    %967 = vmatprep.subr.bf16.mxu0 0
    %968 = vmatpush1.bf16.xpose.msra.mxu0 0
    %969 = vmatprep.subr.bf16.mxu0 0
    %970 = vmatpush1.bf16.xpose.msra.mxu0 0
    %971 = vmatprep.mubr.bf16.mxu0 0
    %972 = vmatmul.mubr.bf16.gmra.mrb[0].mxu0 %v913
    %v973 = vpop.f32.mrb[0].mxu0
    %v974 = vadd.f32 %v871, %v973
    %v975 = vpop.f32.mrb[0].mxu0
    %v976 = vpop.f32.mrb[0].mxu0
    %v977 = vadd.f32 %v871, %v976
    %v978 = vpop.f32.mrb[0].mxu0
    %979 = vdwg.mxu0
    %v980 = vmax.f32 %v974, 0.0
    %v981 = vmax.f32 %v977, 0.0
    %v982 = vpack.c.bf16 %v981, %v980
    %v983 = vlaneseq
    %v984 = vshrl.u32 %v983, 7
    %v985 = vsub.s32 0, %v984
    %v986 = vrot.slane %v75, %v985
    %v1003 = vunpack.c.l.b16 %v56
    %v1004 = vunpack.c.l.b16 %v57
    %v1005 = vunpack.c.l.b16 %v58
    %v1006 = vunpack.c.l.b16 %v59
    %v1007 = vunpack.c.l.b16 %v60
    %v1008 = vunpack.c.l.b16 %v61
    %v1009 = vunpack.c.l.b16 %v62
    %v1010 = vunpack.c.l.b16 %v63
    %v1011 = vunpack.c.l.b16 %v64
    %v1012 = vunpack.c.l.b16 %v65
    %v1013 = vunpack.c.l.b16 %v66
    %v1014 = vunpack.c.l.b16 %v67
    %v1015 = vunpack.c.l.b16 %v68
    %v1016 = vunpack.c.l.b16 %v69
    %v1017 = vunpack.c.l.b16 %v70
    %v1018 = vunpack.c.l.b16 %v71
    %v1019 = vpack.c.b16 %v1004, %v1003
    %v1020 = vpack.c.b16 %v1006, %v1005
    %v1021 = vpack.c.b16 %v1008, %v1007
    %v1022 = vpack.c.b16 %v1010, %v1009
    %v1023 = vpack.c.b16 %v1012, %v1011
    %v1024 = vpack.c.b16 %v1014, %v1013
    %v1025 = vpack.c.b16 %v1016, %v1015
    %v1026 = vpack.c.b16 %v1018, %v1017
    %1035 = vmatprep.subr.bf16.mxu0 0
    %1036 = vmatpush1.bf16.msra.mxu0 %v1019
    %1037 = vmatprep.subr.bf16.mxu0 0
    %1038 = vmatpush1.bf16.msra.mxu0 %v1020
    %1039 = vmatprep.subr.bf16.mxu0 0
    %1040 = vmatpush1.bf16.msra.mxu0 %v1021
    %1041 = vmatprep.subr.bf16.mxu0 0
    %1042 = vmatpush1.bf16.msra.mxu0 %v1022
    %1043 = vmatprep.subr.bf16.mxu0 0
    %1044 = vmatpush1.bf16.msra.mxu0 %v1023
    %1045 = vmatprep.subr.bf16.mxu0 0
    %1046 = vmatpush1.bf16.msra.mxu0 %v1024
    %1047 = vmatprep.subr.bf16.mxu0 0
    %1048 = vmatpush1.bf16.msra.mxu0 %v1025
    %1049 = vmatprep.subr.bf16.mxu0 0
    %1050 = vmatpush1.bf16.msra.mxu0 %v1026
    %1051 = vmatprep.subr.bf16.mxu0 0
    %1052 = vmatpush1.bf16.msra.mxu0 0
    %1053 = vmatprep.subr.bf16.mxu0 0
    %1054 = vmatpush1.bf16.msra.mxu0 0
    %1055 = vmatprep.subr.bf16.mxu0 0
    %1056 = vmatpush1.bf16.msra.mxu0 0
    %1057 = vmatprep.subr.bf16.mxu0 0
    %1058 = vmatpush1.bf16.msra.mxu0 0
    %1059 = vmatprep.subr.bf16.mxu0 0
    %1060 = vmatpush1.bf16.msra.mxu0 0
    %1061 = vmatprep.subr.bf16.mxu0 0
    %1062 = vmatpush1.bf16.msra.mxu0 0
    %1063 = vmatprep.subr.bf16.mxu0 0
    %1064 = vmatpush1.bf16.msra.mxu0 0
    %1065 = vmatprep.subr.bf16.mxu0 0
    %1066 = vmatpush1.bf16.msra.mxu0 0
    %1067 = vmatprep.mubr.bf16.mxu0 0
    %1068 = vmatmul.mubr.bf16.gmra.mrb[0].mxu0 %v982
    %v1069 = vpop.f32.mrb[0].mxu0
    %v1070 = vadd.f32 %v986, %v1069
    %v1071 = vpop.f32.mrb[0].mxu0
    %v1072 = vpop.f32.mrb[0].mxu0
    %v1073 = vadd.f32 %v986, %v1072
    %v1074 = vpop.f32.mrb[0].mxu0
    %1075 = vdwg.mxu0
    %v1076 = vmax.f32 %v1070, 0.0
    %v1077 = vmax.f32 %v1073, 0.0
    %1078 = vst.msk [vmem:[#allocation2] sm:$0xff] %vm93, %v1076
    %1079 = vst.msk [vmem:[#allocation2 + $0x8] sm:$0xff] %vm93, %v1077
    // Predicated region
    $region18: #{transformer_decoder_layer.1} parent=1 // pred_check
      _
    $region19: #{transformer_decoder_layer.1} parent=1 // pred_check_branch
      %1081 = sbr.rel (0) target = $region21
    $region20: #{transformer_decoder_layer.1} parent=1 // pred_region
      %s1083 = ssub.s32 256, 256
      %1084 = vsyncadd [#allocation3], %s1083
      %s1085 = sshll.u32 [#allocation2], 4
      %s1086 = int_to_ptr.vmem [resolvable:$true] %s1085
      %1091 = dma.vmem_to_hbm [thread:$0]  %s1086, 256, %s4, [#allocation3], 128, 128, 8
    $region21: #{transformer_decoder_layer.1} parent=1 // pred_fallthru
      _
    // Predicated region
    $region22: #{transformer_decoder_layer.1} parent=1 // pred_check
      _
    $region23: #{transformer_decoder_layer.1} parent=1 // pred_check_branch
      %1093 = sbr.rel (0) target = $region25
    $region24: #{transformer_decoder_layer.1} parent=1 // pred_region
      %1094 = dma.done [#allocation3], 256
    $region25: #{transformer_decoder_layer.1} parent=1 // pred_fallthru
      _
    %1095 = vsyncpa [#allocation3], 1

</llo_original>
